<compile_context>
chip_gen: v6e
topology: v6e:2x2x1
jax: 0.10.0
libtpu: 0.0.40
codegen_flags: <defaults>
</compile_context>

<pallas_src>
import functools

import jax
import jax.numpy as jnp
from jax.experimental import pallas as pl
from jax.experimental.pallas import tpu as pltpu

_LANES = 128
_DEFAULT_TILE_ROWS = 2048                 # rows of 128 lanes per grid step
_INPUT_VMEM_BUDGET = 24 * 1024 * 1024     # double-buffered input blocks budget
_STRIP_CANDIDATES = (256, 128, 64, 32, 16)


def _sublane_multiple(dtype):
    # f32 -> 8, bf16/f16 -> 16, int8/fp8 -> 32
    return max(8, 32 // jnp.dtype(dtype).itemsize)


def _num_tensorcores():
    """Best-effort count of TensorCores per chip (2 on v7x / megacore parts)."""
    try:
        info = pltpu.get_tpu_info()
        for attr in ("num_cores", "num_tensorcores", "tensor_cores_per_chip",
                     "cores_per_chip", "num_cores_per_chip"):
            v = getattr(info, attr, None)
            if isinstance(v, int) and v >= 1:
                return v
    except Exception:
        pass
    try:
        kind = jax.devices()[0].device_kind.lower()
        if any(t in kind for t in ("v7", "v5p", "v4")):
            return 2
    except Exception:
        pass
    return 1


def _multi_mse_kernel(*refs, n_outputs, rows_valid, tile_rows, tiles_per_split,
                      strip_rows, need_mask, inv_scale):
    tgt_ref = refs[0]
    out_refs = refs[1:1 + n_outputs]
    loss_ref = refs[1 + n_outputs]        # (1, 128) block, one per split
    acc_ref = refs[2 + n_outputs]         # (8, 128) f32 scratch (one vreg)

    c = pl.program_id(0)                  # split index (megacore-parallel)
    j = pl.program_id(1)                  # row-tile index within split

    @pl.when(j == 0)
    def _init():
        acc_ref[...] = jnp.zeros_like(acc_ref)

    # Element-row offset of this tile, computed from the UNCLAMPED logical
    # tile index: a duplicated (clamped) tile of an odd 2-way split lands
    # entirely past rows_valid and is fully zeroed by the mask.
    row0 = (c * tiles_per_split + j) * tile_rows
    n_strips = tile_rows // strip_rows

    def accumulate(masked):
        def strip(s, carry):
            r0 = pl.multiple_of(s * strip_rows, strip_rows)
            tgt = tgt_ref[pl.ds(r0, strip_rows), :].astype(jnp.float32)
            sq_sum = None
            for o_ref in out_refs:
                d = o_ref[pl.ds(r0, strip_rows), :].astype(jnp.float32) - tgt
                sq = d * d
                sq_sum = sq if sq_sum is None else sq_sum + sq
            if masked:
                rid = row0 + r0 + jax.lax.broadcasted_iota(
                    jnp.int32, (strip_rows, _LANES), 0)
                # Post-square select also zeroes garbage (NaN/Inf) rows of a
                # partially DMA'd edge block.
                sq_sum = jnp.where(rid < rows_valid, sq_sum, 0.0)
            # Tree-add sublane groups (pure vreg-vs-vreg VPU adds) into the
            # single-vreg accumulator: almost no acc load/store traffic.
            acc_ref[...] += jnp.sum(
                sq_sum.reshape(strip_rows // 8, 8, _LANES), axis=0)
            return carry
        jax.lax.fori_loop(0, n_strips, strip, 0, unroll=True)

    if need_mask:
        # Only the final (partial / duplicated) tile pays for iota+cmp+select.
        is_edge = row0 + tile_rows > rows_valid
        pl.when(is_edge)(lambda: accumulate(True))
        pl.when(jnp.logical_not(is_edge))(lambda: accumulate(False))
    else:
        accumulate(False)

    @pl.when(j == tiles_per_split - 1)
    def _finalize():
        total = jnp.sum(acc_ref[...]) * inv_scale   # 8x128 cross-lane reduce
        loss_ref[...] = jnp.zeros_like(loss_ref) + total


def multi_mse_loss(outputs_list, targets, scale, *,
                   tile_rows=_DEFAULT_TILE_ROWS, force_splits=None):
    """Pallas implementation of MultiMSELoss.forward. Returns f32 array (1,)."""
    if not isinstance(outputs_list, list):
        raise TypeError("MultiMSELoss, outputs_list type != list")
    n_outputs = len(outputs_list)
    if n_outputs == 0:
        return jnp.zeros((1,), jnp.float32)
    for o in outputs_list:
        if o.shape != targets.shape:
            raise ValueError("output shape must match targets shape")

    itemsizes = [jnp.dtype(targets.dtype).itemsize] + \
                [jnp.dtype(o.dtype).itemsize for o in outputs_list]
    sub = max(_sublane_multiple(targets.dtype),
              *[_sublane_multiple(o.dtype) for o in outputs_list])

    def as_rows128(x):
        flat = x.reshape(-1)              # contiguous reshape: no real HBM copy
        n = flat.shape[0]
        if n % _LANES != 0:
            # Rare fallback (numel not a multiple of 128): whole-tensor pad
            # copy. Both sides are zero-padded so the tail contributes 0.
            pad = -(-n // _LANES) * _LANES - n
            flat = jnp.pad(flat, (0, pad))
        return flat.reshape(-1, _LANES)

    tgt2d = as_rows128(targets)
    outs2d = [as_rows128(o) for o in outputs_list]
    rows = tgt2d.shape[0]

    # Row-tile size: dtype-aware VMEM budget (actual itemsizes, not f32-
    # equivalent), rounded down to the sublane granularity.
    bytes_per_row = _LANES * sum(itemsizes)
    max_rows_budget = max(sub, _INPUT_VMEM_BUDGET // (2 * bytes_per_row))
    tr = min(int(tile_rows), rows, max_rows_budget)
    tr = max(sub, (tr // sub) * sub)

    # Strip size for in-kernel live-range bounding (must divide tr).
    strip_rows = tr
    for cand in _STRIP_CANDIDATES:
        if tr > cand and tr % cand == 0 and cand % sub == 0:
            strip_rows = cand
            break

    total_tiles = -(-rows // tr)
    ncores = force_splits if force_splits is not None else _num_tensorcores()
    num_splits = 2 if (ncores >= 2 and total_tiles >= 2) else 1
    tiles_per_split = -(-total_tiles // num_splits)
    # Mask needed if the last tile is partial OR the 2-way split duplicates
    # the last tile (odd tile count, clamped index_map).
    need_mask = (rows % tr != 0) or (num_splits * tiles_per_split != total_tiles)

    kernel = functools.partial(
        _multi_mse_kernel,
        n_outputs=n_outputs,
        rows_valid=rows,
        tile_rows=tr,
        tiles_per_split=tiles_per_split,
        strip_rows=strip_rows,
        need_mask=need_mask,
        inv_scale=1.0 / float(scale),   # module's scale is an init-time const
    )

    last_tile = total_tiles - 1

    def tile_map(c, j):
        # Clamp so an odd tile count still gets a 2-way split; the duplicated
        # step is zeroed in-kernel via the row mask.
        return (jnp.minimum(c * tiles_per_split + j, last_tile), 0)

    in_specs = [pl.BlockSpec((tr, _LANES), tile_map) for _ in range(n_outputs + 1)]
    # Lane-dense per-split partials, resident across the inner reduction axis.
    out_spec = pl.BlockSpec((1, _LANES), lambda c, j: (0, c))

    # Explicit scoped-VMEM limit: enough for the double-buffered input blocks
    # plus scratch, capped at 48 MiB (safe on v7x's 64 MiB physical VMEM and
    # well under v5e/v6e's 128 MiB).
    vmem_need = (2 * tr * _LANES * sum(itemsizes)          # in blocks, 2 bufs
                 + 8 * _LANES * 4                          # acc scratch
                 + 2 * _LANES * num_splits * 4             # out block bufs
                 + (1 << 20))                              # slack
    vmem_limit = int(min(48 << 20, max(vmem_need + (2 << 20), 16 << 20)))

    in_bytes = (targets.size * jnp.dtype(targets.dtype).itemsize
                + sum(o.size * jnp.dtype(o.dtype).itemsize for o in outputs_list))
    cost = pl.CostEstimate(
        flops=3 * int(targets.size) * n_outputs,
        transcendentals=0,
        bytes_accessed=int(in_bytes) + 4 * _LANES * num_splits,
    )

    partials = pl.pallas_call(
        kernel,
        out_shape=jax.ShapeDtypeStruct((1, _LANES * num_splits), jnp.float32),
        grid_spec=pltpu.PrefetchScalarGridSpec(
            num_scalar_prefetch=0,
            grid=(num_splits, tiles_per_split),
            in_specs=in_specs,
            out_specs=out_spec,
            scratch_shapes=[pltpu.VMEM((8, _LANES), jnp.float32)],
        ),
        compiler_params=pltpu.CompilerParams(
            dimension_semantics=("parallel", "arbitrary"),
            vmem_limit_bytes=vmem_limit,
        ),
        cost_estimate=cost,
    )(tgt2d, *outs2d)

    # Each split's (already scaled) partial sum is broadcast across its 128
    # lanes; pick lane 0 of each split and add them.
    return jnp.sum(partials[:, ::_LANES], axis=1)   # shape (1,), float32


def multi_mse_loss_ref(outputs_list, targets, scale):
    """Pure-JAX reference (mirrors the PyTorch forward)."""
    t = targets.astype(jnp.float32)
    loss = jnp.zeros((1,), jnp.float32)
    for o in outputs_list:
        loss = loss + jnp.sum((o.astype(jnp.float32) - t) ** 2)
    return loss / scale


if __name__ == "__main__":
    key = jax.random.PRNGKey(0)

    # --- Test 1: f32 NCHW, default tiling ------------------------------------
    B, C, H, W = 2, 4, 16, 16
    n_outputs = 3
    scale = 4.0
    keys = jax.random.split(key, n_outputs + 1)
    targets = jax.random.normal(keys[0], (B, C, H, W), dtype=jnp.float32)
    outputs_list = [
        jax.random.normal(keys[i + 1], (B, C, H, W), dtype=jnp.float32)
        for i in range(n_outputs)
    ]
    loss = multi_mse_loss(outputs_list, targets, scale)
    jax.block_until_ready(loss)
    ref = multi_mse_loss_ref(outputs_list, targets, scale)
    assert loss.shape == (1,) and loss.dtype == jnp.float32
    assert jnp.allclose(loss, ref, rtol=1e-5, atol=1e-4), (loss, ref)

    # --- Test 2: larger tensor -> exercises the big row-tile + unrolled
    #             strip-mined inner loop --------------------------------------
    kb = jax.random.split(jax.random.PRNGKey(1), 3)
    tb = jax.random.normal(kb[0], (4, 4, 64, 128), dtype=jnp.float32)
    ob = [jax.random.normal(kb[i + 1], (4, 4, 64, 128), dtype=jnp.float32)
          for i in range(2)]
    loss_b = multi_mse_loss(ob, tb, 3.0)
    jax.block_until_ready(loss_b)
    ref_b = multi_mse_loss_ref(ob, tb, 3.0)
    assert jnp.allclose(loss_b, ref_b, rtol=5e-4, atol=1e-2), (loss_b, ref_b)

    # --- Test 3: small tile + forced 2-way split with an ODD tile count ->
    #             exercises edge-row masking and the clamped duplicate tile ---
    t2 = jax.random.normal(keys[0], (3, 2, 16, 32), dtype=jnp.float32)
    o2 = [jax.random.normal(keys[i + 1], (3, 2, 16, 32), dtype=jnp.float32)
          for i in range(2)]
    loss2 = multi_mse_loss(o2, t2, 2.0, tile_rows=8, force_splits=2)
    jax.block_until_ready(loss2)
    ref2 = multi_mse_loss_ref(o2, t2, 2.0)
    assert jnp.allclose(loss2, ref2, rtol=1e-5, atol=1e-4), (loss2, ref2)

    # --- Test 4: bf16 inputs stay bf16 into the kernel (halved HBM traffic),
    #             f32 accumulation inside the kernel --------------------------
    t3 = targets.astype(jnp.bfloat16)
    o3 = [o.astype(jnp.bfloat16) for o in outputs_list]
    loss3 = multi_mse_loss(o3, t3, scale)
    jax.block_until_ready(loss3)
    ref3 = multi_mse_loss_ref(o3, t3, scale)
    assert jnp.allclose(loss3, ref3, rtol=1e-4, atol=1e-3), (loss3, ref3)

    print("KERNEL_OK")
</pallas_src>

<mosaic_0001>
module attributes {stable_mosaic.version = 11 : i64} {
  func.func @_multi_mse_kernel(%arg0: i32, %arg1: i32, %arg2: memref<16x128xf32, #tpu.memory_space<vmem>>, %arg3: memref<16x128xf32, #tpu.memory_space<vmem>>, %arg4: memref<16x128xf32, #tpu.memory_space<vmem>>, %arg5: memref<16x128xf32, #tpu.memory_space<vmem>>, %arg6: memref<1x128xf32, #tpu.memory_space<vmem>>, %arg7: memref<8x128xf32, #tpu.memory_space<vmem>>) attributes {dimension_semantics = [#tpu.dimension_semantics<parallel>, #tpu.dimension_semantics<arbitrary>], iteration_bounds = array<i64: 1, 1>, scalar_prefetch = 0 : i64, scratch_operands = 1 : i64, tpu.core_type = #tpu.core_type<tc>, window_params = [{transform_indices = @transform_0, window_bounds = array<i64: 16, 128>}, {transform_indices = @transform_1, window_bounds = array<i64: 16, 128>}, {transform_indices = @transform_2, window_bounds = array<i64: 16, 128>}, {transform_indices = @transform_3, window_bounds = array<i64: 16, 128>}, {transform_indices = @transform_4, window_bounds = array<i64: 1, 128>}]} {
    %c0_i32 = arith.constant 0 : i32
    %0 = arith.cmpi eq, %arg1, %c0_i32 : i32
    %1 = arith.extui %0 : i1 to i32
    %c0_i32_0 = arith.constant 0 : i32
    %2 = arith.cmpi ne, %1, %c0_i32_0 : i32
    scf.if %2 {
      %cst_11 = arith.constant 0.000000e+00 : f32
      %29 = vector.broadcast %cst_11 : f32 to vector<8x128xf32>
      %c0_12 = arith.constant 0 : index
      %c0_13 = arith.constant 0 : index
      %30 = vector.load %arg7[%c0_12, %c0_13] : memref<8x128xf32, #tpu.memory_space<vmem>>, vector<8x128xf32>
      tpu.vector_store %arg7[%c0_12, %c0_13], %29 {strides = array<i32>} : memref<8x128xf32, #tpu.memory_space<vmem>>, vector<8x128xf32>,
    } else {
    }
    %c0_i32_1 = arith.constant 0 : i32
    %c16_i32 = arith.constant 16 : i32
    %3 = arith.muli %c0_i32_1, %c16_i32 : i32
    %4 = tpu.assume_multiple %3, 16 : i32
    %5 = arith.index_cast %4 : i32 to index
    %c0 = arith.constant 0 : index
    %6 = vector.load %arg2[%5, %c0] : memref<16x128xf32, #tpu.memory_space<vmem>>, vector<16x128xf32>
    %7 = arith.index_cast %4 : i32 to index
    %c0_2 = arith.constant 0 : index
    %8 = vector.load %arg3[%7, %c0_2] : memref<16x128xf32, #tpu.memory_space<vmem>>, vector<16x128xf32>
    %9 = arith.subf %8, %6 : vector<16x128xf32>
    %10 = arith.mulf %9, %9 : vector<16x128xf32>
    %11 = arith.index_cast %4 : i32 to index
    %c0_3 = arith.constant 0 : index
    %12 = vector.load %arg4[%11, %c0_3] : memref<16x128xf32, #tpu.memory_space<vmem>>, vector<16x128xf32>
    %13 = arith.subf %12, %6 : vector<16x128xf32>
    %14 = arith.mulf %13, %13 : vector<16x128xf32>
    %15 = arith.addf %10, %14 : vector<16x128xf32>
    %16 = arith.index_cast %4 : i32 to index
    %c0_4 = arith.constant 0 : index
    %17 = vector.load %arg5[%16, %c0_4] : memref<16x128xf32, #tpu.memory_space<vmem>>, vector<16x128xf32>
    %18 = arith.subf %17, %6 : vector<16x128xf32>
    %19 = arith.mulf %18, %18 : vector<16x128xf32>
    %20 = arith.addf %15, %19 : vector<16x128xf32>
    %c0_5 = arith.constant 0 : index
    %c0_6 = arith.constant 0 : index
    %21 = vector.load %arg7[%c0_5, %c0_6] : memref<8x128xf32, #tpu.memory_space<vmem>>, vector<8x128xf32>
    %22 = vector.shape_cast %20 : vector<16x128xf32> to vector<2x8x128xf32>
    %cst = arith.constant dense<0.000000e+00> : vector<8x128xf32>
    %23 = vector.multi_reduction <add>, %22, %cst [0] : vector<2x8x128xf32> to vector<8x128xf32>
    %24 = arith.addf %21, %23 : vector<8x128xf32>
    %c0_7 = arith.constant 0 : index
    %c0_8 = arith.constant 0 : index
    %25 = vector.load %arg7[%c0_7, %c0_8] : memref<8x128xf32, #tpu.memory_space<vmem>>, vector<8x128xf32>
    tpu.vector_store %arg7[%c0_7, %c0_8], %24 {strides = array<i32>} : memref<8x128xf32, #tpu.memory_space<vmem>>, vector<8x128xf32>,
    %c1_i32 = arith.constant 1 : i32
    %c0_i32_9 = arith.constant 0 : i32
    %26 = arith.cmpi eq, %arg1, %c0_i32_9 : i32
    %27 = arith.extui %26 : i1 to i32
    %c0_i32_10 = arith.constant 0 : i32
    %28 = arith.cmpi ne, %27, %c0_i32_10 : i32
    scf.if %28 {
      %c0_11 = arith.constant 0 : index
      %c0_12 = arith.constant 0 : index
      %29 = vector.load %arg7[%c0_11, %c0_12] : memref<8x128xf32, #tpu.memory_space<vmem>>, vector<8x128xf32>
      %30 = vector.shape_cast %29 : vector<8x128xf32> to vector<1x8x128xf32>
      %cst_13 = arith.constant dense<0.000000e+00> : vector<1xf32>
      %31 = vector.multi_reduction <add>, %30, %cst_13 [1, 2] : vector<1x8x128xf32> to vector<1xf32>
      %32 = vector.shape_cast %31 : vector<1xf32> to vector<1x1x1xf32>
      %33 = vector.extract %32[0, 0, 0] : f32 from vector<1x1x1xf32>
      %cst_14 = arith.constant 2.500000e-01 : f32
      %34 = arith.mulf %33, %cst_14 : f32
      %cst_15 = arith.constant 0.000000e+00 : f32
      %35 = vector.broadcast %cst_15 : f32 to vector<1x128xf32>
      %36 = vector.broadcast %34 : f32 to vector<1x128xf32>
      %37 = arith.addf %35, %36 : vector<1x128xf32>
      %c0_16 = arith.constant 0 : index
      %c0_17 = arith.constant 0 : index
      %38 = vector.load %arg6[%c0_16, %c0_17] : memref<1x128xf32, #tpu.memory_space<vmem>>, vector<1x128xf32>
      tpu.vector_store %arg6[%c0_16, %c0_17], %37 {strides = array<i32>} : memref<1x128xf32, #tpu.memory_space<vmem>>, vector<1x128xf32>,
    } else {
    }
    return
  }
  func.func @transform_0(%arg0: i32, %arg1: i32) -> (i32, i32) {
    %c1_i32 = arith.constant 1 : i32
    %0 = arith.muli %arg0, %c1_i32 : i32
    %1 = arith.addi %0, %arg1 : i32
    %c0_i32 = arith.constant 0 : i32
    %2 = arith.minsi %1, %c0_i32 : i32
    %c0_i32_0 = arith.constant 0 : i32
    %c0_i32_1 = arith.constant 0 : i32
    return %2, %c0_i32_0 : i32, i32
  }
  func.func @transform_1(%arg0: i32, %arg1: i32) -> (i32, i32) {
    %c1_i32 = arith.constant 1 : i32
    %0 = arith.muli %arg0, %c1_i32 : i32
    %1 = arith.addi %0, %arg1 : i32
    %c0_i32 = arith.constant 0 : i32
    %2 = arith.minsi %1, %c0_i32 : i32
    %c0_i32_0 = arith.constant 0 : i32
    %c0_i32_1 = arith.constant 0 : i32
    return %2, %c0_i32_0 : i32, i32
  }
  func.func @transform_2(%arg0: i32, %arg1: i32) -> (i32, i32) {
    %c1_i32 = arith.constant 1 : i32
    %0 = arith.muli %arg0, %c1_i32 : i32
    %1 = arith.addi %0, %arg1 : i32
    %c0_i32 = arith.constant 0 : i32
    %2 = arith.minsi %1, %c0_i32 : i32
    %c0_i32_0 = arith.constant 0 : i32
    %c0_i32_1 = arith.constant 0 : i32
    return %2, %c0_i32_0 : i32, i32
  }
  func.func @transform_3(%arg0: i32, %arg1: i32) -> (i32, i32) {
    %c1_i32 = arith.constant 1 : i32
    %0 = arith.muli %arg0, %c1_i32 : i32
    %1 = arith.addi %0, %arg1 : i32
    %c0_i32 = arith.constant 0 : i32
    %2 = arith.minsi %1, %c0_i32 : i32
    %c0_i32_0 = arith.constant 0 : i32
    %c0_i32_1 = arith.constant 0 : i32
    return %2, %c0_i32_0 : i32, i32
  }
  func.func @transform_4(%arg0: i32, %arg1: i32) -> (i32, i32) {
    %c0_i32 = arith.constant 0 : i32
    %c0_i32_0 = arith.constant 0 : i32
    return %c0_i32, %arg0 : i32, i32
  }
}

</mosaic_0001>

<llo_original>
// kernel: tpu_custom_call.1
$region0: #{tpu_custom_call.1}
  #allocation0 [shape = 'u32[]', space=smem, size = 0x4, offset = 0x4, fixed_abs, tag = 'smem constant byte address 0x4 - core index']
  #allocation1 [shape = 'u32[144,128]{1,0:T(1,128)}', space=vmem, size = 0x12000, scoped, tag = 'internal scratch']
  #allocation2 [shape = 'f32[8,128]{1,0:T(8,128)}', space=vmem, size = 0x1000, scoped, tag = 'scratch operand']
  %s0 = inlined_call_operand.hbm [shape: f32[16,128], index: 0, kind: input, shape index: {}]
  %s1 = inlined_call_operand.hbm [shape: f32[16,128], index: 1, kind: input, shape index: {}]
  %s2 = inlined_call_operand.hbm [shape: f32[16,128], index: 2, kind: input, shape index: {}]
  %s3 = inlined_call_operand.hbm [shape: f32[16,128], index: 3, kind: input, shape index: {}]
  %s4 = inlined_call_operand.hbm [shape: f32[1,128], index: 4, kind: output, shape index: {}]
  %s5 = sld [smem:[#allocation0]]
  $region50: #{tpu_custom_call.1} parent=0
    _
  %s7 = ssub.s32 1, %s5
  %s8 = scalar_select 0, %s7, %s5
  $region1: #{tpu_custom_call.1} parent=0
    #allocation3 [shape = 'u8[8192]{0}', space=vmem, size = 0x2000, scoped, tag = 'input window, operand 0, single buffered']
    #allocation4 [shape = 's32[1]{0}', space=sflag, size = 0x4, scoped, tag = 'scoped memory for tpu_custom_call.1']
    #allocation5 [shape = 's32[1]{0}', space=sflag, size = 0x4, scoped, tag = 'scoped memory for tpu_custom_call.1']
    #allocation6 [shape = 'u8[8192]{0}', space=vmem, size = 0x2000, scoped, tag = 'input window, operand 1, single buffered']
    #allocation7 [shape = 's32[1]{0}', space=sflag, size = 0x4, scoped, tag = 'scoped memory for tpu_custom_call.1']
    #allocation8 [shape = 'u8[8192]{0}', space=vmem, size = 0x2000, scoped, tag = 'input window, operand 2, single buffered']
    #allocation9 [shape = 'u8[8192]{0}', space=vmem, size = 0x2000, scoped, tag = 'input window, operand 3, single buffered']
    #allocation10 [shape = 's32[1]{0}', space=sflag, size = 0x4, scoped, tag = 'scoped memory for tpu_custom_call.1']
    #allocation11 [shape = 'u8[512]{0}', space=vmem, size = 0x400, scoped, tag = 'output window, operand 0, single buffered']
    %9 = vsyncpa [#allocation4], 0
    %10 = vsyncpa [#allocation7], 0
    %11 = vsyncpa [#allocation10], 0
    %12 = vsyncpa [#allocation5], 0
    // Predicated region
    $region2: #{tpu_custom_call.1} parent=1 // pred_check
      _
    $region3: #{tpu_custom_call.1} parent=1 // pred_check_branch
      %14 = sbr.rel (0) target = $region5
    $region4: #{tpu_custom_call.1} parent=1 // pred_region
      %s15 = sadd.s32 0, 0
      %p16 = scmp.lt.s32.totalorder %s15, 0
      %s17 = scalar_select %p16, %s15, 0
      %s18 = smul.u32 2, %s17
      %s20 = ssub.s32 256, 256
      %21 = vsyncadd [#allocation4], %s20
      %s22 = smul.addr %s18, 128
      %s23 = scalar_lea.hbm %s0, %s22
      %s24 = sshll.u32 [#allocation3], 4
      %s25 = int_to_ptr.vmem [resolvable:$true] %s24
      %30 = dma.hbm_to_vmem [thread:$0]  %s23, 256, %s25, [#allocation4], 128, 128, 8
    $region5: #{tpu_custom_call.1} parent=1 // pred_fallthru
      _
    // Predicated region
    $region6: #{tpu_custom_call.1} parent=1 // pred_check
      _
    $region7: #{tpu_custom_call.1} parent=1 // pred_check_branch
      %32 = sbr.rel (0) target = $region9
    $region8: #{tpu_custom_call.1} parent=1 // pred_region
      %s33 = sadd.s32 0, 0
      %p34 = scmp.lt.s32.totalorder %s33, 0
      %s35 = scalar_select %p34, %s33, 0
      %s36 = smul.u32 2, %s35
      %s38 = ssub.s32 256, 256
      %39 = vsyncadd [#allocation7], %s38
      %s40 = smul.addr %s36, 128
      %s41 = scalar_lea.hbm %s1, %s40
      %s42 = sshll.u32 [#allocation6], 4
      %s43 = int_to_ptr.vmem [resolvable:$true] %s42
      %48 = dma.hbm_to_vmem [thread:$0]  %s41, 256, %s43, [#allocation7], 128, 128, 8
    $region9: #{tpu_custom_call.1} parent=1 // pred_fallthru
      _
    // Predicated region
    $region10: #{tpu_custom_call.1} parent=1 // pred_check
      _
    $region11: #{tpu_custom_call.1} parent=1 // pred_check_branch
      %50 = sbr.rel (0) target = $region13
    $region12: #{tpu_custom_call.1} parent=1 // pred_region
      %s51 = sadd.s32 0, 0
      %p52 = scmp.lt.s32.totalorder %s51, 0
      %s53 = scalar_select %p52, %s51, 0
      %s54 = smul.u32 2, %s53
      %s56 = ssub.s32 256, 256
      %57 = vsyncadd [#allocation7], %s56
      %s58 = smul.addr %s54, 128
      %s59 = scalar_lea.hbm %s2, %s58
      %s60 = sshll.u32 [#allocation8], 4
      %s61 = int_to_ptr.vmem [resolvable:$true] %s60
      %66 = dma.hbm_to_vmem [thread:$0]  %s59, 256, %s61, [#allocation7], 128, 128, 8
    $region13: #{tpu_custom_call.1} parent=1 // pred_fallthru
      _
    // Predicated region
    $region14: #{tpu_custom_call.1} parent=1 // pred_check
      _
    $region15: #{tpu_custom_call.1} parent=1 // pred_check_branch
      %68 = sbr.rel (0) target = $region17
    $region16: #{tpu_custom_call.1} parent=1 // pred_region
      %s69 = sadd.s32 0, 0
      %p70 = scmp.lt.s32.totalorder %s69, 0
      %s71 = scalar_select %p70, %s69, 0
      %s72 = smul.u32 2, %s71
      %s74 = ssub.s32 256, 256
      %75 = vsyncadd [#allocation10], %s74
      %s76 = smul.addr %s72, 128
      %s77 = scalar_lea.hbm %s3, %s76
      %s78 = sshll.u32 [#allocation9], 4
      %s79 = int_to_ptr.vmem [resolvable:$true] %s78
      %84 = dma.hbm_to_vmem [thread:$0]  %s77, 256, %s79, [#allocation10], 128, 128, 8
    $region17: #{tpu_custom_call.1} parent=1 // pred_fallthru
      _
    // Predicated region
    $region18: #{tpu_custom_call.1} parent=1 // pred_check
      _
    $region19: #{tpu_custom_call.1} parent=1 // pred_check_branch
      %86 = sbr.rel (0) target = $region21
    $region20: #{tpu_custom_call.1} parent=1 // pred_region
      %87 = dma.done [#allocation4], 256
    $region21: #{tpu_custom_call.1} parent=1 // pred_fallthru
      _
    // Predicated region
    $region22: #{tpu_custom_call.1} parent=1 // pred_check
      _
    $region23: #{tpu_custom_call.1} parent=1 // pred_check_branch
      %89 = sbr.rel (0) target = $region25
    $region24: #{tpu_custom_call.1} parent=1 // pred_region
      %90 = dma.done [#allocation7], 256
    $region25: #{tpu_custom_call.1} parent=1 // pred_fallthru
      _
    // Predicated region
    $region26: #{tpu_custom_call.1} parent=1 // pred_check
      _
    $region27: #{tpu_custom_call.1} parent=1 // pred_check_branch
      %92 = sbr.rel (0) target = $region29
    $region28: #{tpu_custom_call.1} parent=1 // pred_region
      %93 = dma.done [#allocation7], 256
    $region29: #{tpu_custom_call.1} parent=1 // pred_fallthru
      _
    // Predicated region
    $region30: #{tpu_custom_call.1} parent=1 // pred_check
      _
    $region31: #{tpu_custom_call.1} parent=1 // pred_check_branch
      %95 = sbr.rel (0) target = $region33
    $region32: #{tpu_custom_call.1} parent=1 // pred_region
      %96 = dma.done [#allocation10], 256
    $region33: #{tpu_custom_call.1} parent=1 // pred_fallthru
      _
    %s97 = sadd.s32 0, 0
    %p98 = scmp.lt.s32.totalorder %s97, 0
    %s99 = scalar_select %p98, %s97, 0
    %s100 = smul.u32 2, %s99
    %s101 = sadd.s32 0, 0
    %p102 = scmp.lt.s32.totalorder %s101, 0
    %s103 = scalar_select %p102, %s101, 0
    %s104 = smul.u32 2, %s103
    %s105 = sadd.s32 0, 0
    %p106 = scmp.lt.s32.totalorder %s105, 0
    %s107 = scalar_select %p106, %s105, 0
    %s108 = smul.u32 2, %s107
    %s109 = sadd.s32 0, 0
    %p110 = scmp.lt.s32.totalorder %s109, 0
    %s111 = scalar_select %p110, %s109, 0
    %s112 = smul.u32 2, %s111
    %p113 = scmp.eq.s32.totalorder 0, 0
    // Predicated region
    $region34: #{tpu_custom_call.1} parent=1 // pred_check
      %p114 = pneg %p113
    $region35: #{tpu_custom_call.1} parent=1 // pred_check_branch
      %116 = sbr.rel (%p114) target = $region37
    $region36: #{tpu_custom_call.1} parent=1 // pred_region
      %117 = vst [vmem:[#allocation2] sm:$0xff] 0.0
    $region37: #{tpu_custom_call.1} parent=1 // pred_fallthru
      _
    %v118 = vld [vmem:[#allocation3] sm:$0xff]
    %v119 = vld [vmem:[#allocation3 + $0x8] sm:$0xff]
    %v120 = vld [vmem:[#allocation6] sm:$0xff]
    %v121 = vld [vmem:[#allocation6 + $0x8] sm:$0xff]
    %v122 = vsub.f32 %v120, %v118
    %v123 = vsub.f32 %v121, %v119
    %v124 = vmul.f32 %v122, %v122
    %v125 = vmul.f32 %v123, %v123
    %v126 = vld [vmem:[#allocation8] sm:$0xff]
    %v127 = vld [vmem:[#allocation8 + $0x8] sm:$0xff]
    %v128 = vsub.f32 %v126, %v118
    %v129 = vsub.f32 %v127, %v119
    %v130 = vmul.f32 %v128, %v128
    %v131 = vmul.f32 %v129, %v129
    %v132 = vadd.f32 %v124, %v130
    %v133 = vadd.f32 %v125, %v131
    %v134 = vld [vmem:[#allocation9] sm:$0xff]
    %v135 = vld [vmem:[#allocation9 + $0x8] sm:$0xff]
    %v136 = vsub.f32 %v134, %v118
    %v137 = vsub.f32 %v135, %v119
    %v138 = vmul.f32 %v136, %v136
    %v139 = vmul.f32 %v137, %v137
    %v140 = vadd.f32 %v132, %v138
    %v141 = vadd.f32 %v133, %v139
    %v142 = vld [vmem:[#allocation2] sm:$0xff]
    %v143 = vadd.f32 %v140, %v141
    %v144 = vadd.f32 %v142, %v143
    %145 = vst [vmem:[#allocation2] sm:$0xff] %v144
    // Predicated region
    $region38: #{tpu_custom_call.1} parent=1 // pred_check
      %p146 = pneg %p113
    $region39: #{tpu_custom_call.1} parent=1 // pred_check_branch
      %148 = sbr.rel (%p146) target = $region41
    $region40: #{tpu_custom_call.1} parent=1 // pred_region
      %v149 = vld [vmem:[#allocation2] sm:$0xff]
      %150 = vadd.xlane.f32.xlu0 %v149
      %v151 = vpop.xlane.xlu0 %150
      %v152 = vrot.slane %v151, 4
      %v153 = vadd.f32 %v151, %v152
      %v154 = vrot.slane %v153, 2
      %v155 = vadd.f32 %v153, %v154
      %v156 = vrot.slane %v155, 1
      %v157 = vadd.f32 %v155, %v156
      %s158 = vtos %v157
      %s159 = smul.f32 %s158, 0.25
      %v160 = vstv %s159
      %v161 = vadd.f32 %v160, 0.0
      %162 = vst [vmem:[#allocation11] sm:$0x1] %v161
    $region41: #{tpu_custom_call.1} parent=1 // pred_fallthru
      _
    // Predicated region
    $region42: #{tpu_custom_call.1} parent=1 // pred_check
      _
    $region43: #{tpu_custom_call.1} parent=1 // pred_check_branch
      %164 = sbr.rel (0) target = $region45
    $region44: #{tpu_custom_call.1} parent=1 // pred_region
      %s166 = ssub.s32 16, 16
      %167 = vsyncadd [#allocation5], %s166
      %s169 = sshll.u32 [#allocation11], 4
      %s170 = int_to_ptr.vmem [resolvable:$true] %s169
      %172 = dma.vmem_to_hbm [thread:$0]  %s170, 16, %s4, [#allocation5]
    $region45: #{tpu_custom_call.1} parent=1 // pred_fallthru
      _
    // Predicated region
    $region46: #{tpu_custom_call.1} parent=1 // pred_check
      _
    $region47: #{tpu_custom_call.1} parent=1 // pred_check_branch
      %174 = sbr.rel (0) target = $region49
    $region48: #{tpu_custom_call.1} parent=1 // pred_region
      %175 = dma.done [#allocation5], 16
    $region49: #{tpu_custom_call.1} parent=1 // pred_fallthru
      _
    %176 = vsyncpa [#allocation4], 1
    %177 = vsyncpa [#allocation7], 1
    %178 = vsyncpa [#allocation10], 1
    %179 = vsyncpa [#allocation5], 1

</llo_original>
